<compile_context>
chip_gen: v7x
topology: tpu7x:2x2x1
jax: 0.10.0
libtpu: 0.0.40
codegen_flags: <defaults>
</compile_context>

<pallas_src>
import functools
import math

import jax
import jax.numpy as jnp
from jax.experimental import pallas as pl
from jax.experimental.pallas import tpu as pltpu


def _time_embed_kernel(x_ref, w_ref, b_ref, g_ref, beta_ref, o_ref, *, inv_n):
    # x_ref:    (tm, K)       row tile of flattened (B*L, time_num)
    # w_ref:    (K, Np)       conv weight transposed (k=1 conv == matmul), N-padded
    # b_ref:    (1, Np)       conv bias (zero in padded lanes)
    # g_ref:    (1, Np)       LayerNorm gamma (zero in padded lanes)
    # beta_ref: (1, Np)       LayerNorm beta  (zero in padded lanes)
    # o_ref:    (tm, Np)
    x = x_ref[...]
    w = w_ref[...]
    bias = b_ref[...]
    K = x.shape[-1]

    if K <= 8:
        # Tiny contraction: unrolled VPU broadcast multiply-adds; skips the
        # near-empty MXU pass entirely.
        y = bias + x[:, 0:1] * w[0:1, :]
        for k in range(1, K):
            y = y + x[:, k:k + 1] * w[k:k + 1, :]
    else:
        y = jnp.dot(x, w, preferred_element_type=jnp.float32) + bias

    # Single-pass LayerNorm statistics over the *true* model_dim (padded output
    # lanes of y are exactly zero, so plain sums are correct; divide by real N).
    s1 = jnp.sum(y, axis=-1, keepdims=True)
    s2 = jnp.sum(y * y, axis=-1, keepdims=True)
    mean = s1 * inv_n
    var = s2 * inv_n - mean * mean
    y_hat = (y - mean) * jax.lax.rsqrt(var + 1e-5)
    # gamma/beta are zero in padded lanes -> padded output lanes are zero.
    o_ref[...] = (y_hat * g_ref[...] + beta_ref[...]).astype(o_ref.dtype)


def _round_up(a, b):
    return ((a + b - 1) // b) * b


def _working_set_bytes(tm, K, n_pad):
    # double-buffered x tile + out tile, double-buffered constants (tiny).
    return 4 * (2 * tm * (K + n_pad) + 2 * (K + 3) * n_pad)


def _choose_tile(M, K, n_pad, tm_req, budget_bytes=24 * 1024 * 1024):
    tm = min(_round_up(max(tm_req, 8), 8), _round_up(M, 8))
    while tm > 8 and _working_set_bytes(tm, K, n_pad) > budget_bytes:
        tm = _round_up(tm // 2, 8)
    return tm


def time_embedding(x, conv_w, conv_b, ln_gamma, ln_beta, *, tm=512,
                   out_dtype=jnp.float32):
    """x: (B, L, time_num) float32 -> (B, L, model_dim) in out_dtype."""
    B, L, K = x.shape
    N = conv_w.shape[0]          # model_dim
    M = B * L

    n_pad = _round_up(N, 128)                     # lane-dense output
    tm_eff = _choose_tile(M, K, n_pad, tm)
    grid_m = pl.cdiv(M, tm_eff)
    m_pad = grid_m * tm_eff

    x2d = x.reshape(M, K).astype(jnp.float32)
    if m_pad != M:
        x2d = jnp.pad(x2d, ((0, m_pad - M), (0, 0)))

    w_t = conv_w.reshape(N, K).T.astype(jnp.float32)   # (K, N); conv weight is (N, K, 1)
    b2d = conv_b.reshape(1, N).astype(jnp.float32)
    g2d = ln_gamma.reshape(1, N).astype(jnp.float32)
    be2d = ln_beta.reshape(1, N).astype(jnp.float32)
    if n_pad != N:
        pad_n = ((0, 0), (0, n_pad - N))
        w_t = jnp.pad(w_t, pad_n)
        b2d = jnp.pad(b2d, pad_n)
        g2d = jnp.pad(g2d, pad_n)
        be2d = jnp.pad(be2d, pad_n)

    # Explicit scoped-VMEM limit: at least the default 32 MiB, at most 64 MiB
    # (fits v7x physical VMEM); actual usage is _working_set_bytes + slack.
    est = _working_set_bytes(tm_eff, K, n_pad)
    vmem_limit = int(min(64 * 1024 * 1024, max(32 * 1024 * 1024, 2 * est)))

    kernel = functools.partial(_time_embed_kernel, inv_n=1.0 / float(N))

    out2d = pl.pallas_call(
        kernel,
        out_shape=jax.ShapeDtypeStruct((m_pad, n_pad), out_dtype),
        grid_spec=pltpu.PrefetchScalarGridSpec(
            num_scalar_prefetch=0,
            grid=(grid_m,),
            in_specs=[
                pl.BlockSpec((tm_eff, K), lambda i: (i, 0)),
                pl.BlockSpec((K, n_pad), lambda i: (0, 0)),
                pl.BlockSpec((1, n_pad), lambda i: (0, 0)),
                pl.BlockSpec((1, n_pad), lambda i: (0, 0)),
                pl.BlockSpec((1, n_pad), lambda i: (0, 0)),
            ],
            out_specs=pl.BlockSpec((tm_eff, n_pad), lambda i: (i, 0)),
        ),
        compiler_params=pltpu.CompilerParams(
            dimension_semantics=("parallel",),
            vmem_limit_bytes=vmem_limit),
    )(x2d, w_t, b2d, g2d, be2d)

    return out2d[:M, :N].reshape(B, L, N)


def init_params(key, model_dim, time_num):
    """Deterministic init mirroring the module's __init__ (synthetic, no checkpoint)."""
    k_w, k_b = jax.random.split(key)
    # kaiming_normal_(mode='fan_in', nonlinearity='leaky_relu', a=0.01)
    fan_in = time_num * 1  # kernel_size = 1
    gain = math.sqrt(2.0 / (1.0 + 0.01 ** 2))
    std = gain / math.sqrt(fan_in)
    conv_w = std * jax.random.normal(k_w, (model_dim, time_num, 1), dtype=jnp.float32)
    # Conv1d default bias init: U(-1/sqrt(fan_in), 1/sqrt(fan_in))
    bound = 1.0 / math.sqrt(fan_in)
    conv_b = jax.random.uniform(k_b, (model_dim,), minval=-bound, maxval=bound,
                                dtype=jnp.float32)
    # LayerNorm defaults
    ln_gamma = jnp.ones((model_dim,), dtype=jnp.float32)
    ln_beta = jnp.zeros((model_dim,), dtype=jnp.float32)
    return conv_w, conv_b, ln_gamma, ln_beta


def _reference(x, conv_w, conv_b, ln_gamma, ln_beta):
    # Pure-JAX reference of the PyTorch forward.
    w = conv_w[..., 0]                                  # (N, K)
    y = jnp.einsum('blk,nk->bln', x, w) + conv_b        # conv1d(k=1)
    mean = jnp.mean(y, axis=-1, keepdims=True)
    var = jnp.mean((y - mean) ** 2, axis=-1, keepdims=True)
    return (y - mean) / jnp.sqrt(var + 1e-5) * ln_gamma + ln_beta


if __name__ == "__main__":
    key = jax.random.PRNGKey(0)

    # --- Case 1: the module's nominal small shape -------------------------
    B, L = 2, 8          # batch, sequence length
    time_num = 4         # input time-feature channels
    model_dim = 32       # embedding dim (gets lane-padded to 128 internally)
    k_x, k_p = jax.random.split(key)
    x = jax.random.normal(k_x, (B, L, time_num), dtype=jnp.float32)
    conv_w, conv_b, ln_gamma, ln_beta = init_params(k_p, model_dim, time_num)

    out = time_embedding(x, conv_w, conv_b, ln_gamma, ln_beta)
    out = jax.block_until_ready(out)
    ref = _reference(x, conv_w, conv_b, ln_gamma, ln_beta)
    assert out.shape == (B, L, model_dim)
    assert jnp.allclose(out, ref, atol=1e-4, rtol=1e-4)

    # --- Case 2: non-divisible B*L and model_dim, multi-step grid ---------
    B2, L2, td2, md2 = 3, 50, 4, 96
    k_x2, k_p2 = jax.random.split(jax.random.PRNGKey(1))
    x2 = jax.random.normal(k_x2, (B2, L2, td2), dtype=jnp.float32)
    p2 = init_params(k_p2, md2, td2)
    out2 = jax.block_until_ready(time_embedding(x2, *p2, tm=64))
    ref2 = _reference(x2, *p2)
    assert out2.shape == (B2, L2, md2)
    assert jnp.allclose(out2, ref2, atol=1e-4, rtol=1e-4)

    print("KERNEL_OK")
</pallas_src>

<mosaic_0001>
module attributes {stable_mosaic.version = 11 : i64} {
  func.func @_time_embed_kernel(%arg0: i32, %arg1: memref<16x4xf32, #tpu.memory_space<vmem>>, %arg2: memref<4x128xf32, #tpu.memory_space<vmem>>, %arg3: memref<1x128xf32, #tpu.memory_space<vmem>>, %arg4: memref<1x128xf32, #tpu.memory_space<vmem>>, %arg5: memref<1x128xf32, #tpu.memory_space<vmem>>, %arg6: memref<16x128xf32, #tpu.memory_space<vmem>>) attributes {dimension_semantics = [#tpu.dimension_semantics<parallel>], iteration_bounds = array<i64: 1>, scalar_prefetch = 0 : i64, scratch_operands = 0 : i64, tpu.core_type = #tpu.core_type<tc>, window_params = [{transform_indices = @transform_0, window_bounds = array<i64: 16, 4>}, {pipeline_mode = #tpu.pipeline_mode<synchronous>, transform_indices = @transform_1, window_bounds = array<i64: 4, 128>}, {pipeline_mode = #tpu.pipeline_mode<synchronous>, transform_indices = @transform_2, window_bounds = array<i64: 1, 128>}, {pipeline_mode = #tpu.pipeline_mode<synchronous>, transform_indices = @transform_3, window_bounds = array<i64: 1, 128>}, {pipeline_mode = #tpu.pipeline_mode<synchronous>, transform_indices = @transform_4, window_bounds = array<i64: 1, 128>}, {transform_indices = @transform_5, window_bounds = array<i64: 16, 128>}]} {
    %c0 = arith.constant 0 : index
    %c0_0 = arith.constant 0 : index
    %0 = vector.load %arg1[%c0, %c0_0] : memref<16x4xf32, #tpu.memory_space<vmem>>, vector<16x4xf32>
    %c0_1 = arith.constant 0 : index
    %c0_2 = arith.constant 0 : index
    %1 = vector.load %arg2[%c0_1, %c0_2] : memref<4x128xf32, #tpu.memory_space<vmem>>, vector<4x128xf32>
    %c0_3 = arith.constant 0 : index
    %c0_4 = arith.constant 0 : index
    %2 = vector.load %arg3[%c0_3, %c0_4] : memref<1x128xf32, #tpu.memory_space<vmem>>, vector<1x128xf32>
    %3 = vector.extract_strided_slice %0 {offsets = [0, 0], sizes = [16, 1], strides = [1, 1]} : vector<16x4xf32> to vector<16x1xf32>
    %4 = vector.extract_strided_slice %1 {offsets = [0, 0], sizes = [1, 128], strides = [1, 1]} : vector<4x128xf32> to vector<1x128xf32>
    %5 = vector.broadcast %3 : vector<16x1xf32> to vector<16x128xf32>
    %6 = vector.broadcast %4 : vector<1x128xf32> to vector<16x128xf32>
    %7 = arith.mulf %5, %6 : vector<16x128xf32>
    %8 = vector.broadcast %2 : vector<1x128xf32> to vector<16x128xf32>
    %9 = arith.addf %8, %7 : vector<16x128xf32>
    %10 = vector.extract_strided_slice %0 {offsets = [0, 1], sizes = [16, 1], strides = [1, 1]} : vector<16x4xf32> to vector<16x1xf32>
    %11 = vector.extract_strided_slice %1 {offsets = [1, 0], sizes = [1, 128], strides = [1, 1]} : vector<4x128xf32> to vector<1x128xf32>
    %12 = vector.broadcast %10 : vector<16x1xf32> to vector<16x128xf32>
    %13 = vector.broadcast %11 : vector<1x128xf32> to vector<16x128xf32>
    %14 = arith.mulf %12, %13 : vector<16x128xf32>
    %15 = arith.addf %9, %14 : vector<16x128xf32>
    %16 = vector.extract_strided_slice %0 {offsets = [0, 2], sizes = [16, 1], strides = [1, 1]} : vector<16x4xf32> to vector<16x1xf32>
    %17 = vector.extract_strided_slice %1 {offsets = [2, 0], sizes = [1, 128], strides = [1, 1]} : vector<4x128xf32> to vector<1x128xf32>
    %18 = vector.broadcast %16 : vector<16x1xf32> to vector<16x128xf32>
    %19 = vector.broadcast %17 : vector<1x128xf32> to vector<16x128xf32>
    %20 = arith.mulf %18, %19 : vector<16x128xf32>
    %21 = arith.addf %15, %20 : vector<16x128xf32>
    %22 = vector.extract_strided_slice %0 {offsets = [0, 3], sizes = [16, 1], strides = [1, 1]} : vector<16x4xf32> to vector<16x1xf32>
    %23 = vector.extract_strided_slice %1 {offsets = [3, 0], sizes = [1, 128], strides = [1, 1]} : vector<4x128xf32> to vector<1x128xf32>
    %24 = vector.broadcast %22 : vector<16x1xf32> to vector<16x128xf32>
    %25 = vector.broadcast %23 : vector<1x128xf32> to vector<16x128xf32>
    %26 = arith.mulf %24, %25 : vector<16x128xf32>
    %27 = arith.addf %21, %26 : vector<16x128xf32>
    %cst = arith.constant dense<0.000000e+00> : vector<16xf32>
    %28 = vector.multi_reduction <add>, %27, %cst [1] : vector<16x128xf32> to vector<16xf32>
    %29 = vector.shape_cast %28 : vector<16xf32> to vector<16x1xf32>
    %30 = arith.mulf %27, %27 : vector<16x128xf32>
    %cst_5 = arith.constant dense<0.000000e+00> : vector<16xf32>
    %31 = vector.multi_reduction <add>, %30, %cst_5 [1] : vector<16x128xf32> to vector<16xf32>
    %32 = vector.shape_cast %31 : vector<16xf32> to vector<16x1xf32>
    %cst_6 = arith.constant 3.125000e-02 : f32
    %33 = vector.broadcast %cst_6 : f32 to vector<16x1xf32>
    %34 = arith.mulf %29, %33 : vector<16x1xf32>
    %cst_7 = arith.constant 3.125000e-02 : f32
    %35 = vector.broadcast %cst_7 : f32 to vector<16x1xf32>
    %36 = arith.mulf %32, %35 : vector<16x1xf32>
    %37 = arith.mulf %34, %34 : vector<16x1xf32>
    %38 = arith.subf %36, %37 : vector<16x1xf32>
    %39 = vector.broadcast %34 : vector<16x1xf32> to vector<16x128xf32>
    %40 = arith.subf %27, %39 : vector<16x128xf32>
    %cst_8 = arith.constant 9.99999974E-6 : f32
    %41 = vector.broadcast %cst_8 : f32 to vector<16x1xf32>
    %42 = arith.addf %38, %41 : vector<16x1xf32>
    %43 = math.rsqrt %42 : vector<16x1xf32>
    %44 = vector.broadcast %43 : vector<16x1xf32> to vector<16x128xf32>
    %45 = arith.mulf %40, %44 : vector<16x128xf32>
    %c0_9 = arith.constant 0 : index
    %c0_10 = arith.constant 0 : index
    %46 = vector.load %arg4[%c0_9, %c0_10] : memref<1x128xf32, #tpu.memory_space<vmem>>, vector<1x128xf32>
    %47 = vector.broadcast %46 : vector<1x128xf32> to vector<16x128xf32>
    %48 = arith.mulf %45, %47 : vector<16x128xf32>
    %c0_11 = arith.constant 0 : index
    %c0_12 = arith.constant 0 : index
    %49 = vector.load %arg5[%c0_11, %c0_12] : memref<1x128xf32, #tpu.memory_space<vmem>>, vector<1x128xf32>
    %50 = vector.broadcast %49 : vector<1x128xf32> to vector<16x128xf32>
    %51 = arith.addf %48, %50 : vector<16x128xf32>
    %c0_13 = arith.constant 0 : index
    %c0_14 = arith.constant 0 : index
    %52 = vector.load %arg6[%c0_13, %c0_14] : memref<16x128xf32, #tpu.memory_space<vmem>>, vector<16x128xf32>
    tpu.vector_store %arg6[%c0_13, %c0_14], %51 {strides = array<i32>} : memref<16x128xf32, #tpu.memory_space<vmem>>, vector<16x128xf32>,
    return
  }
  func.func @transform_0(%arg0: i32) -> (i32, i32) {
    %c0_i32 = arith.constant 0 : i32
    %c0_i32_0 = arith.constant 0 : i32
    return %arg0, %c0_i32 : i32, i32
  }
  func.func @transform_1(%arg0: i32) -> (i32, i32) {
    %c0_i32 = arith.constant 0 : i32
    %c0_i32_0 = arith.constant 0 : i32
    %c0_i32_1 = arith.constant 0 : i32
    return %c0_i32, %c0_i32_0 : i32, i32
  }
  func.func @transform_2(%arg0: i32) -> (i32, i32) {
    %c0_i32 = arith.constant 0 : i32
    %c0_i32_0 = arith.constant 0 : i32
    %c0_i32_1 = arith.constant 0 : i32
    return %c0_i32, %c0_i32_0 : i32, i32
  }
  func.func @transform_3(%arg0: i32) -> (i32, i32) {
    %c0_i32 = arith.constant 0 : i32
    %c0_i32_0 = arith.constant 0 : i32
    %c0_i32_1 = arith.constant 0 : i32
    return %c0_i32, %c0_i32_0 : i32, i32
  }
  func.func @transform_4(%arg0: i32) -> (i32, i32) {
    %c0_i32 = arith.constant 0 : i32
    %c0_i32_0 = arith.constant 0 : i32
    %c0_i32_1 = arith.constant 0 : i32
    return %c0_i32, %c0_i32_0 : i32, i32
  }
  func.func @transform_5(%arg0: i32) -> (i32, i32) {
    %c0_i32 = arith.constant 0 : i32
    %c0_i32_0 = arith.constant 0 : i32
    return %arg0, %c0_i32 : i32, i32
  }
}

</mosaic_0001>

<llo_original>
// kernel: tpu_custom_call.1
$region0: #{tpu_custom_call.1}
  #allocation0 [shape = 'u32[]', space=smem, size = 0x4, offset = 0x4, fixed_abs, tag = 'smem constant byte address 0x4 - core index']
  #allocation1 [shape = 'u32[144,128]{1,0:T(1,128)}', space=vmem, size = 0x12000, scoped, tag = 'internal scratch']
  %s0 = inlined_call_operand.vmem [shape: f32[16,4], index: 0, kind: input, shape index: {}]
  %s1 = inlined_call_operand.vmem [shape: f32[4,128], index: 1, kind: input, shape index: {}]
  %s2 = inlined_call_operand.vmem [shape: f32[1,128], index: 2, kind: input, shape index: {}]
  %s3 = inlined_call_operand.vmem [shape: f32[1,128], index: 3, kind: input, shape index: {}]
  %s4 = inlined_call_operand.vmem [shape: f32[1,128], index: 4, kind: input, shape index: {}]
  %s5 = inlined_call_operand.hbm [shape: f32[16,128], index: 5, kind: output, shape index: {}]
  %s6 = sld [smem:[#allocation0]]
  $region30: #{tpu_custom_call.1} parent=0
    _
  %s8 = ssub.s32 1, %s6
  %s9 = scalar_select 0, %s8, %s6
  $region1: #{tpu_custom_call.1} parent=0
    #allocation2 [shape = 'u8[8192]{0}', space=vmem, size = 0x2000, scoped, tag = 'output window, operand 0, single buffered']
    #allocation3 [shape = 's32[1]{0}', space=sflag, size = 0x4, scoped, tag = 'scoped memory for tpu_custom_call.1']
    %10 = vsyncpa [#allocation3], 0
    // Predicated region
    $region2: #{tpu_custom_call.1} parent=1 // pred_check
      _
    $region3: #{tpu_custom_call.1} parent=1 // pred_check_branch
      %12 = sbr.rel (0) target = $region5
    $region4: #{tpu_custom_call.1} parent=1 // pred_region
      _
    $region5: #{tpu_custom_call.1} parent=1 // pred_fallthru
      _
    // Predicated region
    $region6: #{tpu_custom_call.1} parent=1 // pred_check
      _
    $region7: #{tpu_custom_call.1} parent=1 // pred_check_branch
      %14 = sbr.rel (0) target = $region9
    $region8: #{tpu_custom_call.1} parent=1 // pred_region
      _
    $region9: #{tpu_custom_call.1} parent=1 // pred_fallthru
      _
    // Predicated region
    $region10: #{tpu_custom_call.1} parent=1 // pred_check
      _
    $region11: #{tpu_custom_call.1} parent=1 // pred_check_branch
      %16 = sbr.rel (0) target = $region13
    $region12: #{tpu_custom_call.1} parent=1 // pred_region
      _
    $region13: #{tpu_custom_call.1} parent=1 // pred_fallthru
      _
    // Predicated region
    $region14: #{tpu_custom_call.1} parent=1 // pred_check
      _
    $region15: #{tpu_custom_call.1} parent=1 // pred_check_branch
      %18 = sbr.rel (0) target = $region17
    $region16: #{tpu_custom_call.1} parent=1 // pred_region
      _
    $region17: #{tpu_custom_call.1} parent=1 // pred_fallthru
      _
    // Predicated region
    $region18: #{tpu_custom_call.1} parent=1 // pred_check
      _
    $region19: #{tpu_custom_call.1} parent=1 // pred_check_branch
      %20 = sbr.rel (0) target = $region21
    $region20: #{tpu_custom_call.1} parent=1 // pred_region
      _
    $region21: #{tpu_custom_call.1} parent=1 // pred_fallthru
      _
    %v21 = vld [vmem:[%s0] sm:$0xff]
    %v22 = vld [vmem:[%s0 + $0x8] sm:$0xff]
    %v23 = vld [vmem:[%s1] sm:$0xf]
    %v24 = vld [vmem:[%s2] sm:$0x1]
    %26 = vset.pattern.permute.xlu0 0
    %27 = vperm.xlu0 %26, %v21
    %v28 = vpop.permute.xlu0 %27
    %31 = vset.pattern.permute.xlu0 0
    %32 = vperm.xlu0 %31, %v22
    %v33 = vpop.permute.xlu0 %32
    %v35 = vlaneseq
    %v36 = vshrl.u32 %v35, 7
    %v37 = vsub.s32 0, %v36
    %v38 = vrot.slane %v23, %v37
    %v39 = vmul.f32 %v28, %v38
    %v40 = vmul.f32 %v33, %v38
    %v42 = vlaneseq
    %v43 = vshrl.u32 %v42, 7
    %v44 = vsub.s32 0, %v43
    %v45 = vrot.slane %v24, %v44
    %v47 = vadd.f32 %v45, %v39
    %v48 = vadd.f32 %v45, %v40
    %49 = vset.pattern.permute.xlu0 1
    %50 = vperm.xlu0 %49, %v21
    %v51 = vpop.permute.xlu0 %50
    %53 = vset.pattern.permute.xlu0 1
    %54 = vperm.xlu0 %53, %v22
    %v55 = vpop.permute.xlu0 %54
    %v57 = vlaneseq
    %v58 = vshrl.u32 %v57, 7
    %v59 = vsub.s32 1, %v58
    %v60 = vrot.slane %v23, %v59
    %v61 = vmul.f32 %v51, %v60
    %v62 = vmul.f32 %v55, %v60
    %v63 = vadd.f32 %v47, %v61
    %v64 = vadd.f32 %v48, %v62
    %65 = vset.pattern.permute.xlu0 2
    %66 = vperm.xlu0 %65, %v21
    %v67 = vpop.permute.xlu0 %66
    %69 = vset.pattern.permute.xlu0 2
    %70 = vperm.xlu0 %69, %v22
    %v71 = vpop.permute.xlu0 %70
    %v73 = vlaneseq
    %v74 = vshrl.u32 %v73, 7
    %v75 = vsub.s32 2, %v74
    %v76 = vrot.slane %v23, %v75
    %v77 = vmul.f32 %v67, %v76
    %v78 = vmul.f32 %v71, %v76
    %v79 = vadd.f32 %v63, %v77
    %v80 = vadd.f32 %v64, %v78
    %81 = vset.pattern.permute.xlu0 3
    %82 = vperm.xlu0 %81, %v21
    %v83 = vpop.permute.xlu0 %82
    %85 = vset.pattern.permute.xlu0 3
    %86 = vperm.xlu0 %85, %v22
    %v87 = vpop.permute.xlu0 %86
    %v89 = vlaneseq
    %v90 = vshrl.u32 %v89, 7
    %v91 = vsub.s32 3, %v90
    %v92 = vrot.slane %v23, %v91
    %v93 = vmul.f32 %v83, %v92
    %v94 = vmul.f32 %v87, %v92
    %v95 = vadd.f32 %v79, %v93
    %v96 = vadd.f32 %v80, %v94
    %97 = vadd.xlane.f32.xlu0 %v95
    %v98 = vpop.xlane.xlu0 %97
    %99 = vadd.xlane.f32.xlu0 %v96
    %v100 = vpop.xlane.xlu0 %99
    %v101 = vmul.f32 %v95, %v95
    %v102 = vmul.f32 %v96, %v96
    %103 = vadd.xlane.f32.xlu0 %v101
    %v104 = vpop.xlane.xlu0 %103
    %105 = vadd.xlane.f32.xlu0 %v102
    %v106 = vpop.xlane.xlu0 %105
    %v107 = vmul.f32 %v98, 0.03125
    %v108 = vmul.f32 %v100, 0.03125
    %v109 = vmul.f32 %v104, 0.03125
    %v110 = vmul.f32 %v106, 0.03125
    %v111 = vmul.f32 %v107, %v107
    %v112 = vmul.f32 %v108, %v108
    %v113 = vsub.f32 %v109, %v111
    %v114 = vsub.f32 %v110, %v112
    %v115 = vsub.f32 %v95, %v107
    %v116 = vsub.f32 %v96, %v108
    %v117 = vadd.f32 %v113, 1e-05
    %v118 = vadd.f32 %v114, 1e-05
    %v119 = vrsqrt.pop %v117
    %v120 = vrsqrt.pop %v118
    %v121 = vmul.f32 %v115, %v119
    %v122 = vmul.f32 %v116, %v120
    %v123 = vld [vmem:[%s3] sm:$0x1]
    %v125 = vlaneseq
    %v126 = vshrl.u32 %v125, 7
    %v127 = vsub.s32 0, %v126
    %v128 = vrot.slane %v123, %v127
    %v130 = vmul.f32 %v121, %v128
    %v131 = vmul.f32 %v122, %v128
    %v132 = vld [vmem:[%s4] sm:$0x1]
    %v134 = vlaneseq
    %v135 = vshrl.u32 %v134, 7
    %v136 = vsub.s32 0, %v135
    %v137 = vrot.slane %v132, %v136
    %v139 = vadd.f32 %v130, %v137
    %v140 = vadd.f32 %v131, %v137
    %141 = vst [vmem:[#allocation2] sm:$0xff] %v139
    %142 = vst [vmem:[#allocation2 + $0x8] sm:$0xff] %v140
    // Predicated region
    $region22: #{tpu_custom_call.1} parent=1 // pred_check
      _
    $region23: #{tpu_custom_call.1} parent=1 // pred_check_branch
      %144 = sbr.rel (0) target = $region25
    $region24: #{tpu_custom_call.1} parent=1 // pred_region
      %s146 = ssub.s32 256, 256
      %147 = vsyncadd [#allocation3], %s146
      %s148 = sshll.u32 [#allocation2], 4
      %s149 = int_to_ptr.vmem [resolvable:$true] %s148
      %154 = dma.vmem_to_hbm [thread:$0]  %s149, 256, %s5, [#allocation3], 128, 128, 8
    $region25: #{tpu_custom_call.1} parent=1 // pred_fallthru
      _
    // Predicated region
    $region26: #{tpu_custom_call.1} parent=1 // pred_check
      _
    $region27: #{tpu_custom_call.1} parent=1 // pred_check_branch
      %156 = sbr.rel (0) target = $region29
    $region28: #{tpu_custom_call.1} parent=1 // pred_region
      %157 = dma.done [#allocation3], 256
    $region29: #{tpu_custom_call.1} parent=1 // pred_fallthru
      _
    %158 = vsyncpa [#allocation3], 1

</llo_original>
